<compile_context>
chip_gen: v7x
topology: tpu7x:2x2x1
jax: 0.10.0
libtpu: 0.0.40
codegen_flags: <defaults>
</compile_context>

<pallas_src>
import jax
import jax.numpy as jnp
from jax.experimental import pallas as pl
from jax.experimental.pallas import tpu as pltpu

LANE = 128


def _round_up(x, m):
    return (x + m - 1) // m * m


# ----------------------------------------------------------------------------
# Backbone kernel: one im2col matmul per spatial tile -> ReLU -> incremental
# global-average-pool into the resident [1, 1, F_pad] output block.
#   p_ref: [1, TM, K_pad]   bf16 im2col patch tile (one image, TM pixels)
#   w_ref: [K_pad, F_pad]   bf16 reshaped conv weight (resident)
#   o_ref: [1, 1, F_pad]    fp32 pooled features (accumulator across t axis)
# ----------------------------------------------------------------------------
def make_backbone_kernel(inv_hw):
    def backbone_kernel(p_ref, w_ref, o_ref):
        t = pl.program_id(1)

        @pl.when(t == 0)
        def _init():
            o_ref[...] = jnp.zeros_like(o_ref)

        # Single MXU matmul: [TM, K_pad] x [K_pad, F_pad] -> fp32 [TM, F_pad].
        y = jnp.dot(p_ref[0], w_ref[...], preferred_element_type=jnp.float32)
        y = jnp.maximum(y, 0.0)                              # ReLU
        # Partial sum over this tile's pixels -> pooled accumulator.
        o_ref[...] += jnp.sum(y, axis=0, keepdims=True)[None]

        @pl.when(t == pl.num_programs(1) - 1)
        def _finalize():
            o_ref[...] = o_ref[...] * inv_hw                 # mean over H*W

    return backbone_kernel


# ----------------------------------------------------------------------------
# Head kernel: features = bn(linear(features)), tiled over the embed dim.
# BatchNorm1d stats are per-feature, so column tiling is exact; the full batch
# is kept per tile (do NOT tile over B).
#   f_ref: [B, F_pad] fp32    w_ref: [F_pad, TE] bf16
#   b_ref/g_ref/be_ref: [1, TE] fp32    o_ref: [B, TE] fp32
# ----------------------------------------------------------------------------
def head_kernel(f_ref, w_ref, b_ref, g_ref, be_ref, o_ref):
    y = jnp.dot(f_ref[...].astype(jnp.bfloat16), w_ref[...],
                preferred_element_type=jnp.float32) + b_ref[...]
    mean = jnp.mean(y, axis=0, keepdims=True)
    var = jnp.mean((y - mean) ** 2, axis=0, keepdims=True)   # biased (PyTorch BN)
    xhat = (y - mean) * jax.lax.rsqrt(var + 1e-5)
    o_ref[...] = xhat * g_ref[...] + be_ref[...]


# ----------------------------------------------------------------------------
# Wrapper
# ----------------------------------------------------------------------------
def encoder_cnn_forward(images_nchw, params, *, tm=128, te=128):
    B, Cin, H, W = images_nchw.shape
    conv_w = params["conv_w"]                     # [3, 3, Cin, F]
    F = conv_w.shape[-1]
    E = params["lin_w"].shape[-1]

    K = 9 * Cin
    K_pad = _round_up(K, LANE)
    F_pad = _round_up(F, LANE)
    E_pad = _round_up(E, LANE)

    # NCHW -> NHWC, zero-pad spatially for 3x3 stride-1 "same" conv.
    x = jnp.transpose(images_nchw, (0, 2, 3, 1)).astype(jnp.float32)
    xp = jnp.pad(x, ((0, 0), (1, 1), (1, 1), (0, 0)))

    # im2col slab [B, H*W, 9*Cin]: one lane-dense matmul instead of 9 taps.
    taps = [xp[:, dh:dh + H, dw:dw + W, :] for dh in range(3) for dw in range(3)]
    patches = jnp.stack(taps, axis=3).reshape(B, H * W, K)
    patches = jnp.pad(patches, ((0, 0), (0, 0), (0, K_pad - K))).astype(jnp.bfloat16)

    w_im2col = conv_w.reshape(K, F)
    w_im2col = jnp.pad(w_im2col, ((0, K_pad - K), (0, F_pad - F))).astype(jnp.bfloat16)

    HW = H * W
    tm = min(tm, HW)
    if HW % tm != 0:
        tm = HW                                    # fallback: one tile per image
    n_row_tiles = HW // tm

    # Explicit VMEM budget: double-buffered inputs/output + compiler headroom.
    backbone_vmem = 2 * (tm * K_pad * 2 + K_pad * F_pad * 2 + F_pad * 4) + (8 << 20)

    backbone = pl.pallas_call(
        make_backbone_kernel(1.0 / HW),
        out_shape=jax.ShapeDtypeStruct((B, 1, F_pad), jnp.float32),
        grid_spec=pltpu.PrefetchScalarGridSpec(
            num_scalar_prefetch=0,
            grid=(B, n_row_tiles),                               # reduction axis last
            in_specs=[
                pl.BlockSpec((1, tm, K_pad), lambda b, t: (b, t, 0)),
                pl.BlockSpec((K_pad, F_pad), lambda b, t: (0, 0)),  # resident weight
            ],
            out_specs=pl.BlockSpec((1, 1, F_pad), lambda b, t: (b, 0, 0)),
        ),
        compiler_params=pltpu.CompilerParams(
            dimension_semantics=("parallel", "arbitrary"),
            vmem_limit_bytes=backbone_vmem),
    )
    feats = backbone(patches, w_im2col)                          # [B, 1, F_pad]
    feats = jax.lax.stop_gradient(feats.reshape(B, F_pad))       # frozen backbone

    # Head params, zero-padded to lane-dense shapes (padded cols stay exactly 0
    # through linear+BN and are sliced off at the end).
    lin_w = jnp.pad(params["lin_w"], ((0, F_pad - F), (0, E_pad - E))).astype(jnp.bfloat16)
    lin_b = jnp.pad(params["lin_b"], (0, E_pad - E)).reshape(1, E_pad).astype(jnp.float32)
    gamma = jnp.pad(params["bn_gamma"], (0, E_pad - E)).reshape(1, E_pad).astype(jnp.float32)
    beta = jnp.pad(params["bn_beta"], (0, E_pad - E)).reshape(1, E_pad).astype(jnp.float32)

    te = min(te, E_pad)
    n_e_tiles = E_pad // te
    head_vmem = 2 * (B * F_pad * 4 + F_pad * te * 2 + 3 * te * 4 + B * te * 4) + (8 << 20)

    out = pl.pallas_call(
        head_kernel,
        out_shape=jax.ShapeDtypeStruct((B, E_pad), jnp.float32),
        grid_spec=pltpu.PrefetchScalarGridSpec(
            num_scalar_prefetch=0,
            grid=(n_e_tiles,),
            in_specs=[
                pl.BlockSpec((B, F_pad), lambda e: (0, 0)),
                pl.BlockSpec((F_pad, te), lambda e: (0, e)),
                pl.BlockSpec((1, te), lambda e: (0, e)),
                pl.BlockSpec((1, te), lambda e: (0, e)),
                pl.BlockSpec((1, te), lambda e: (0, e)),
            ],
            out_specs=pl.BlockSpec((B, te), lambda e: (0, e)),
        ),
        compiler_params=pltpu.CompilerParams(
            dimension_semantics=("parallel",),
            vmem_limit_bytes=head_vmem),
    )(feats, lin_w, lin_b, gamma, beta)

    return out[:, :E]


def init_params(key, cin=4, feat_dim=32, embed_size=32):
    k1, k2, k3 = jax.random.split(key, 3)
    conv_w = jax.random.normal(k1, (3, 3, cin, feat_dim), jnp.float32) * 0.1
    lin_w = jax.random.normal(k2, (feat_dim, embed_size), jnp.float32) * 0.1
    # PyTorch Linear bias: shape (E,), uniform(-1/sqrt(F), 1/sqrt(F)).
    bound = 1.0 / (feat_dim ** 0.5)
    lin_b = jax.random.uniform(k3, (embed_size,), jnp.float32, -bound, bound)
    bn_gamma = jnp.ones((embed_size,), jnp.float32)
    bn_beta = jnp.zeros((embed_size,), jnp.float32)
    return {
        "conv_w": conv_w,
        "lin_w": lin_w,
        "lin_b": lin_b,
        "bn_gamma": bn_gamma,
        "bn_beta": bn_beta,
    }


if __name__ == "__main__":
    key = jax.random.PRNGKey(0)
    kx, kp = jax.random.split(key)

    B, Cin, H, W = 2, 4, 16, 16
    feat_dim, embed_size = 32, 32

    images = jax.random.normal(kx, (B, Cin, H, W), jnp.float32)
    params = init_params(kp, cin=Cin, feat_dim=feat_dim, embed_size=embed_size)

    out = encoder_cnn_forward(images, params)
    out = jax.block_until_ready(out)
    assert out.shape == (B, embed_size) and out.dtype == jnp.float32
    print("KERNEL_OK")
</pallas_src>

<mosaic_0001>
module attributes {stable_mosaic.version = 11 : i64} {
  func.func @backbone_kernel(%arg0: i32, %arg1: i32, %arg2: memref<1x128x128xbf16, #tpu.memory_space<vmem>>, %arg3: memref<128x128xbf16, #tpu.memory_space<vmem>>, %arg4: memref<1x1x128xf32, #tpu.memory_space<vmem>>) attributes {dimension_semantics = [#tpu.dimension_semantics<parallel>, #tpu.dimension_semantics<arbitrary>], iteration_bounds = array<i64: 2, 2>, scalar_prefetch = 0 : i64, scratch_operands = 0 : i64, tpu.core_type = #tpu.core_type<tc>, window_params = [{transform_indices = @transform_0, window_bounds = array<i64: 1, 128, 128>}, {pipeline_mode = #tpu.pipeline_mode<synchronous>, transform_indices = @transform_1, window_bounds = array<i64: 128, 128>}, {transform_indices = @transform_2, window_bounds = array<i64: 1, 1, 128>}]} {
    %c0_i32 = arith.constant 0 : i32
    %0 = arith.cmpi eq, %arg1, %c0_i32 : i32
    %1 = arith.extui %0 : i1 to i32
    %c0_i32_0 = arith.constant 0 : i32
    %2 = arith.cmpi ne, %1, %c0_i32_0 : i32
    scf.if %2 {
      %cst_14 = arith.constant 0.000000e+00 : f32
      %18 = vector.broadcast %cst_14 : f32 to vector<1x1x128xf32>
      %c0_15 = arith.constant 0 : index
      %c0_16 = arith.constant 0 : index
      %c0_17 = arith.constant 0 : index
      %19 = vector.load %arg4[%c0_15, %c0_16, %c0_17] : memref<1x1x128xf32, #tpu.memory_space<vmem>>, vector<1x1x128xf32>
      tpu.vector_store %arg4[%c0_15, %c0_16, %c0_17], %18 {strides = array<i32>} : memref<1x1x128xf32, #tpu.memory_space<vmem>>, vector<1x1x128xf32>,
    } else {
    }
    %c0 = arith.constant 0 : index
    %c0_1 = arith.constant 0 : index
    %c0_2 = arith.constant 0 : index
    %3 = vector.load %arg2[%c0, %c0_1, %c0_2] : memref<1x128x128xbf16, #tpu.memory_space<vmem>>, vector<1x128x128xbf16>
    %4 = vector.shape_cast %3 : vector<1x128x128xbf16> to vector<128x128xbf16>
    %c0_3 = arith.constant 0 : index
    %c0_4 = arith.constant 0 : index
    %5 = vector.load %arg3[%c0_3, %c0_4] : memref<128x128xbf16, #tpu.memory_space<vmem>>, vector<128x128xbf16>
    %cst = arith.constant dense<0.000000e+00> : vector<128x128xf32>
    %6 = tpu.matmul %4, %5, %cst {dimension_numbers = #tpu.dot_dimension_numbers<[1], [0], [0], [1], [0, 0, 1, 1], [], []>} : vector<128x128xbf16>, vector<128x128xbf16>, vector<128x128xf32> -> vector<128x128xf32>
    %cst_5 = arith.constant 0.000000e+00 : f32
    %7 = vector.broadcast %cst_5 : f32 to vector<128x128xf32>
    %8 = arith.maximumf %6, %7 : vector<128x128xf32>
    %c0_6 = arith.constant 0 : index
    %c0_7 = arith.constant 0 : index
    %c0_8 = arith.constant 0 : index
    %9 = vector.load %arg4[%c0_6, %c0_7, %c0_8] : memref<1x1x128xf32, #tpu.memory_space<vmem>>, vector<1x1x128xf32>
    %cst_9 = arith.constant dense<0.000000e+00> : vector<128xf32>
    %10 = vector.multi_reduction <add>, %8, %cst_9 [0] : vector<128x128xf32> to vector<128xf32>
    %11 = vector.shape_cast %10 : vector<128xf32> to vector<1x128xf32>
    %12 = vector.shape_cast %11 : vector<1x128xf32> to vector<1x1x128xf32>
    %13 = arith.addf %9, %12 : vector<1x1x128xf32>
    %c0_10 = arith.constant 0 : index
    %c0_11 = arith.constant 0 : index
    %c0_12 = arith.constant 0 : index
    %14 = vector.load %arg4[%c0_10, %c0_11, %c0_12] : memref<1x1x128xf32, #tpu.memory_space<vmem>>, vector<1x1x128xf32>
    tpu.vector_store %arg4[%c0_10, %c0_11, %c0_12], %13 {strides = array<i32>} : memref<1x1x128xf32, #tpu.memory_space<vmem>>, vector<1x1x128xf32>,
    %c1_i32 = arith.constant 1 : i32
    %15 = arith.cmpi eq, %arg1, %c1_i32 : i32
    %16 = arith.extui %15 : i1 to i32
    %c0_i32_13 = arith.constant 0 : i32
    %17 = arith.cmpi ne, %16, %c0_i32_13 : i32
    scf.if %17 {
      %c0_14 = arith.constant 0 : index
      %c0_15 = arith.constant 0 : index
      %c0_16 = arith.constant 0 : index
      %18 = vector.load %arg4[%c0_14, %c0_15, %c0_16] : memref<1x1x128xf32, #tpu.memory_space<vmem>>, vector<1x1x128xf32>
      %cst_17 = arith.constant 3.906250e-03 : f32
      %19 = vector.broadcast %cst_17 : f32 to vector<1x1x128xf32>
      %20 = arith.mulf %18, %19 : vector<1x1x128xf32>
      %c0_18 = arith.constant 0 : index
      %c0_19 = arith.constant 0 : index
      %c0_20 = arith.constant 0 : index
      %21 = vector.load %arg4[%c0_18, %c0_19, %c0_20] : memref<1x1x128xf32, #tpu.memory_space<vmem>>, vector<1x1x128xf32>
      tpu.vector_store %arg4[%c0_18, %c0_19, %c0_20], %20 {strides = array<i32>} : memref<1x1x128xf32, #tpu.memory_space<vmem>>, vector<1x1x128xf32>,
    } else {
    }
    return
  }
  func.func @transform_0(%arg0: i32, %arg1: i32) -> (i32, i32, i32) {
    %c0_i32 = arith.constant 0 : i32
    %c0_i32_0 = arith.constant 0 : i32
    return %arg0, %arg1, %c0_i32 : i32, i32, i32
  }
  func.func @transform_1(%arg0: i32, %arg1: i32) -> (i32, i32) {
    %c0_i32 = arith.constant 0 : i32
    %c0_i32_0 = arith.constant 0 : i32
    %c0_i32_1 = arith.constant 0 : i32
    return %c0_i32, %c0_i32_0 : i32, i32
  }
  func.func @transform_2(%arg0: i32, %arg1: i32) -> (i32, i32, i32) {
    %c0_i32 = arith.constant 0 : i32
    %c0_i32_0 = arith.constant 0 : i32
    %c0_i32_1 = arith.constant 0 : i32
    return %arg0, %c0_i32, %c0_i32_0 : i32, i32, i32
  }
}

</mosaic_0001>

<llo_original>
// kernel: tpu_custom_call.1
$region0: #{tpu_custom_call.1}
  #allocation0 [shape = 'u32[]', space=smem, size = 0x4, offset = 0x4, fixed_abs, tag = 'smem constant byte address 0x4 - core index']
  #allocation1 [shape = 'u32[144,128]{1,0:T(1,128)}', space=vmem, size = 0x12000, scoped, tag = 'internal scratch']
  %s0 = inlined_call_operand.hbm [shape: bf16[2,256,128], index: 0, kind: input, shape index: {}]
  %s1 = inlined_call_operand.hbm [shape: bf16[128,128], index: 1, kind: input, shape index: {}]
  %s2 = inlined_call_operand.hbm [shape: f32[2,1,128], index: 2, kind: output, shape index: {}]
  %s3 = sld [smem:[#allocation0]]
  $region57: #{tpu_custom_call.1} parent=0
    _
  %s5 = ssub.s32 1, %s3
  %s6 = scalar_select 0, %s5, %s3
  $region1: #{tpu_custom_call.1} parent=0
    #allocation2 [shape = 'u8[65536]{0}', space=vmem, size = 0x10000, scoped, tag = 'input window, operand 0']
    #allocation3 [shape = 's32[2]{0}', space=sflag, size = 0x8, scoped, tag = 'scoped memory for tpu_custom_call.1']
    #allocation4 [shape = 's32[2]{0}', space=sflag, size = 0x8, scoped, tag = 'scoped memory for tpu_custom_call.1']
    #allocation5 [shape = 'u8[32768]{0}', space=vmem, size = 0x8000, scoped, tag = 'input window, operand 1, single buffered']
    #allocation6 [shape = 's32[1]{0}', space=sflag, size = 0x4, scoped, tag = 'scoped memory for tpu_custom_call.1']
    #allocation7 [shape = 'u8[1024]{0}', space=vmem, size = 0x400, scoped, tag = 'output window, operand 0']
    %7 = vsyncpa [#allocation3], 0
    %s8 = scalar_lea.sflag [#allocation3], 1
    %9 = vsyncpa %s8, 0
    %10 = vsyncpa [#allocation6], 0
    %11 = vsyncpa [#allocation4], 0
    %s12 = scalar_lea.sflag [#allocation4], 1
    %13 = vsyncpa %s12, 0
    loop: start=0, step=1, limit=6
    $region2: #{tpu_custom_call.1} parent=1 // loop_pre_header
      _
    $region3: #{tpu_custom_call.1} parent=1 // loop_header
      %s15 = sphi 0, %s19
      %p16 = scmp.ge.s32.totalorder %s15, 6
      %s22 = sphi 0, %s34
      %s23 = sphi 0, %s30
      %s24 = sphi 0, %s22
      %s25 = sphi 0, %s23
      %s26 = sphi 0, %s24
      %s27 = sphi 0, %s25
      %s39 = sphi 0, %s41
      %s42 = sphi 0, %s39
      %s43 = sphi 0, %s42
      %s59 = sphi 0, %s43
      %s63 = sphi 0, %s63
      %s65 = sphi 0, %s63
      %s66 = sphi 0, %s65
      %s80 = sphi 0, %s66
      %s86 = sphi 0, %s88
      %s89 = sphi 0, %s86
      %s90 = sphi 0, %s89
      %s106 = sphi 0, %s90
    $region4: #{tpu_custom_call.1} parent=1 // loop_header_branch
      %18 = sbr.rel (%p16) target = $region8
    $region5: #{tpu_custom_call.1} parent=1 // loop_body
      %s20 = ssub.s32 %s15, 1
      %s21 = ssub.s32 %s15, 2
      %s28 = sadd.s32 1, %s23
      %p29 = scmp.ge.s32.totalorder %s28, 2
      %s30 = scalar_select %p29, 0, %s28
      %s31 = sadd.s32 1, %s22
      %s32 = scalar_select %p29, %s31, %s22
      %p33 = scmp.ge.s32.totalorder %s32, 2
      %s34 = scalar_select %p33, 0, %s32
      %s35 = ssub.s32 %s22, %s34
      %s36 = ssub.s32 %s23, %s30
      %s37 = sor.u32 %s35, %s36
      %p38 = scmp.eq.s32.totalorder %s37, 0
      %s40 = sadd.s32 %s39, 1
      %s41 = scalar_select %p38, %s39, %s40
      %p44 = pneg %p38
      %p45 = scmp.eq.s32.totalorder %s15, 3
      %p46 = por %p44, %p45
      %p47 = scmp.ne.s32.totalorder %s39, %s42
      %p48 = scmp.eq.s32.totalorder %s15, 0
      %p49 = por %p47, %p48
      %p50 = scmp.ne.s32.totalorder %s39, %s42
      %p51 = scmp.eq.s32.totalorder %s20, 3
      %p52 = por %p50, %p51
      %p53 = scmp.ne.s32.totalorder %s42, %s43
      %p54 = scmp.eq.s32.totalorder %s20, 0
      %p55 = por %p53, %p54
      %p56 = scmp.ne.s32.totalorder %s42, %s43
      %p57 = scmp.eq.s32.totalorder %s21, 3
      %p58 = por %p56, %p57
      %p60 = scmp.ne.s32.totalorder %s43, %s59
      %p61 = scmp.eq.s32.totalorder %s21, 0
      %p62 = por %p60, %p61
      %s64 = sadd.s32 %s63, 1
      %p67 = scmp.eq.s32.totalorder %s15, 3
      %p68 = scmp.ne.s32.totalorder %s63, %s65
      %p69 = scmp.eq.s32.totalorder %s15, 0
      %p70 = por %p68, %p69
      %p71 = scmp.ne.s32.totalorder %s63, %s65
      %p72 = scmp.eq.s32.totalorder %s20, 3
      %p73 = por %p71, %p72
      %p74 = scmp.ne.s32.totalorder %s65, %s66
      %p75 = scmp.eq.s32.totalorder %s20, 0
      %p76 = por %p74, %p75
      %p77 = scmp.ne.s32.totalorder %s65, %s66
      %p78 = scmp.eq.s32.totalorder %s21, 3
      %p79 = por %p77, %p78
      %p81 = scmp.ne.s32.totalorder %s66, %s80
      %p82 = scmp.eq.s32.totalorder %s21, 0
      %p83 = por %p81, %p82
      %s84 = ssub.s32 %s22, %s34
      %p85 = scmp.eq.s32.totalorder %s84, 0
      %s87 = sadd.s32 %s86, 1
      %s88 = scalar_select %p85, %s86, %s87
      %p91 = pneg %p85
      %p92 = scmp.eq.s32.totalorder %s15, 3
      %p93 = por %p91, %p92
      %p94 = scmp.ne.s32.totalorder %s86, %s89
      %p95 = scmp.eq.s32.totalorder %s15, 0
      %p96 = por %p94, %p95
      %p97 = scmp.ne.s32.totalorder %s86, %s89
      %p98 = scmp.eq.s32.totalorder %s20, 3
      %p99 = por %p97, %p98
      %p100 = scmp.ne.s32.totalorder %s89, %s90
      %p101 = scmp.eq.s32.totalorder %s20, 0
      %p102 = por %p100, %p101
      %p103 = scmp.ne.s32.totalorder %s89, %s90
      %p104 = scmp.eq.s32.totalorder %s21, 3
      %p105 = por %p103, %p104
      %p107 = scmp.ne.s32.totalorder %s90, %s106
      %p108 = scmp.eq.s32.totalorder %s21, 0
      %p109 = por %p107, %p108
      %p110 = scmp.le.s32.totalorder 1, %s15
      %p111 = scmp.lt.s32.totalorder %s15, 5
      %p112 = pnand %p110, %p111
      %p113 = pneg %p112
      // Predicated region
      $region9: #{tpu_custom_call.1} parent=5 // pred_check
        _
      $region10: #{tpu_custom_call.1} parent=5 // pred_check_branch
        %115 = sbr.rel (%p112) target = $region12
      $region11: #{tpu_custom_call.1} parent=5 // pred_region
        %s116 = ssub.s32 %s15, 1
        // Predicated region
        $region13: #{tpu_custom_call.1} parent=11 // pred_check
          %p117 = pneg %p76
        $region14: #{tpu_custom_call.1} parent=11 // pred_check_branch
          %119 = sbr.rel (%p117) target = $region16
        $region15: #{tpu_custom_call.1} parent=11 // pred_region
          %s121 = ssub.s32 1024, 1024
          %122 = vsyncadd [#allocation6], %s121
          %s123 = sshll.u32 [#allocation5], 4
          %s124 = int_to_ptr.vmem [resolvable:$true] %s123
          %129 = dma.hbm_to_vmem [thread:$0]  %s1, 1024, %s124, [#allocation6], 64, 64, 4
        $region16: #{tpu_custom_call.1} parent=11 // pred_fallthru
          _
      $region12: #{tpu_custom_call.1} parent=5 // pred_fallthru
        _
      %p130 = scmp.lt.s32.totalorder %s15, 4
      // Predicated region
      $region17: #{tpu_custom_call.1} parent=5 // pred_check
        %p131 = pneg %p130
      $region18: #{tpu_custom_call.1} parent=5 // pred_check_branch
        %133 = sbr.rel (%p131) target = $region20
      $region19: #{tpu_custom_call.1} parent=5 // pred_region
        // Predicated region
        $region21: #{tpu_custom_call.1} parent=19 // pred_check
          %p134 = pneg %p49
        $region22: #{tpu_custom_call.1} parent=19 // pred_check_branch
          %136 = sbr.rel (%p134) target = $region24
        $region23: #{tpu_custom_call.1} parent=19 // pred_region
          %s137 = sand.u32 %s39, 1
          %s138 = scalar_lea.sflag [#allocation3], %s137
          %s139 = sand.u32 %s39, 1
          %s140 = smul.addr %s139, 64
          %s141 = scalar_lea.vmem [#allocation2], %s140
          %s142 = smul.u32 16, %s23
          %s144 = ssub.s32 1024, 1024
          %145 = vsyncadd %s138, %s144
          %s146 = smul.addr %s22, 32
          %s147 = sadd.s32 %s142, %s146
          %s148 = smul.addr %s147, 64
          %s149 = scalar_lea.hbm %s0, %s148
          %s150 = sshll.u32 %s141, 4
          %s151 = int_to_ptr.vmem [resolvable:$true] %s150
          %156 = dma.hbm_to_vmem [thread:$0]  %s149, 1024, %s151, %s138, 64, 64, 4
        $region24: #{tpu_custom_call.1} parent=19 // pred_fallthru
          _
      $region20: #{tpu_custom_call.1} parent=5 // pred_fallthru
        _
      %p157 = scmp.le.s32.totalorder 1, %s15
      %p158 = scmp.lt.s32.totalorder %s15, 5
      %p159 = pnand %p157, %p158
      %p160 = pneg %p159
      // Predicated region
      $region25: #{tpu_custom_call.1} parent=5 // pred_check
        _
      $region26: #{tpu_custom_call.1} parent=5 // pred_check_branch
        %162 = sbr.rel (%p159) target = $region28
      $region27: #{tpu_custom_call.1} parent=5 // pred_region
        %s163 = ssub.s32 %s15, 1
        %s164 = sand.u32 %s42, 1
        %s165 = scalar_lea.sflag [#allocation3], %s164
        %s166 = sand.u32 %s42, 1
        %s167 = smul.addr %s166, 64
        %s168 = scalar_lea.vmem [#allocation2], %s167
        // Predicated region
        $region29: #{tpu_custom_call.1} parent=27 // pred_check
          %p169 = pneg %p55
        $region30: #{tpu_custom_call.1} parent=27 // pred_check_branch
          %171 = sbr.rel (%p169) target = $region32
        $region31: #{tpu_custom_call.1} parent=27 // pred_region
          %172 = dma.done %s165, 1024
        $region32: #{tpu_custom_call.1} parent=27 // pred_fallthru
          _
        // Predicated region
        $region33: #{tpu_custom_call.1} parent=27 // pred_check
          %p173 = pneg %p76
        $region34: #{tpu_custom_call.1} parent=27 // pred_check_branch
          %175 = sbr.rel (%p173) target = $region36
        $region35: #{tpu_custom_call.1} parent=27 // pred_region
          %176 = dma.done [#allocation6], 1024
        $region36: #{tpu_custom_call.1} parent=27 // pred_fallthru
          _
        %s177 = sand.u32 %s42, 1
        %s178 = scalar_lea.sflag [#allocation3], %s177
        %s179 = sand.u32 %s42, 1
        %s180 = smul.addr %s179, 64
        %s181 = scalar_lea.vmem [#allocation2], %s180
        %p182 = pneg %p55
        %p183 = pneg %p52
        %p184 = pneg %p76
        %p185 = pneg %p73
        %p186 = pneg %p102
        %p187 = pneg %p99
        %s188 = sand.u32 %s89, 1
        %s189 = scalar_lea.sflag [#allocation4], %s188
        %s190 = sand.u32 %s89, 1
        %s191 = scalar_lea.vmem [#allocation7], %s190
        %s192 = smul.u32 16, %s25
        %p194 = scmp.eq.s32.totalorder %s25, 0
        // Predicated region
        $region37: #{tpu_custom_call.1} parent=27 // pred_check
          %p195 = pneg %p194
        $region38: #{tpu_custom_call.1} parent=27 // pred_check_branch
          %197 = sbr.rel (%p195) target = $region40
        $region39: #{tpu_custom_call.1} parent=27 // pred_region
          %198 = vst [vmem:[%s191] sm:$0x1] 0.0
        $region40: #{tpu_custom_call.1} parent=27 // pred_fallthru
          _
        %v199 = vld [vmem:[%s168] sm:$0xf]
        %v200 = vld [vmem:[%s168 + $0x4] sm:$0xf]
        %v201 = vld [vmem:[%s168 + $0x8] sm:$0xf]
        %v202 = vld [vmem:[%s168 + $0xc] sm:$0xf]
        %v203 = vld [vmem:[%s168 + $0x10] sm:$0xf]
        %v204 = vld [vmem:[%s168 + $0x14] sm:$0xf]
        %v205 = vld [vmem:[%s168 + $0x18] sm:$0xf]
        %v206 = vld [vmem:[%s168 + $0x1c] sm:$0xf]
        %v207 = vld [vmem:[%s168 + $0x20] sm:$0xf]
        %v208 = vld [vmem:[%s168 + $0x24] sm:$0xf]
        %v209 = vld [vmem:[%s168 + $0x28] sm:$0xf]
        %v210 = vld [vmem:[%s168 + $0x2c] sm:$0xf]
        %v211 = vld [vmem:[%s168 + $0x30] sm:$0xf]
        %v212 = vld [vmem:[%s168 + $0x34] sm:$0xf]
        %v213 = vld [vmem:[%s168 + $0x38] sm:$0xf]
        %v214 = vld [vmem:[%s168 + $0x3c] sm:$0xf]
        %v215 = vld [vmem:[#allocation5] sm:$0xf]
        %v216 = vld [vmem:[#allocation5 + $0x4] sm:$0xf]
        %v217 = vld [vmem:[#allocation5 + $0x8] sm:$0xf]
        %v218 = vld [vmem:[#allocation5 + $0xc] sm:$0xf]
        %v219 = vld [vmem:[#allocation5 + $0x10] sm:$0xf]
        %v220 = vld [vmem:[#allocation5 + $0x14] sm:$0xf]
        %v221 = vld [vmem:[#allocation5 + $0x18] sm:$0xf]
        %v222 = vld [vmem:[#allocation5 + $0x1c] sm:$0xf]
        %v223 = vld [vmem:[#allocation5 + $0x20] sm:$0xf]
        %v224 = vld [vmem:[#allocation5 + $0x24] sm:$0xf]
        %v225 = vld [vmem:[#allocation5 + $0x28] sm:$0xf]
        %v226 = vld [vmem:[#allocation5 + $0x2c] sm:$0xf]
        %v227 = vld [vmem:[#allocation5 + $0x30] sm:$0xf]
        %v228 = vld [vmem:[#allocation5 + $0x34] sm:$0xf]
        %v229 = vld [vmem:[#allocation5 + $0x38] sm:$0xf]
        %v230 = vld [vmem:[#allocation5 + $0x3c] sm:$0xf]
        %v247 = vunpack.c.l.b16 %v199
        %v248 = vunpack.c.l.b16 %v200
        %v249 = vunpack.c.l.b16 %v201
        %v250 = vunpack.c.l.b16 %v202
        %v251 = vunpack.c.l.b16 %v203
        %v252 = vunpack.c.l.b16 %v204
        %v253 = vunpack.c.l.b16 %v205
        %v254 = vunpack.c.l.b16 %v206
        %v255 = vunpack.c.l.b16 %v207
        %v256 = vunpack.c.l.b16 %v208
        %v257 = vunpack.c.l.b16 %v209
        %v258 = vunpack.c.l.b16 %v210
        %v259 = vunpack.c.l.b16 %v211
        %v260 = vunpack.c.l.b16 %v212
        %v261 = vunpack.c.l.b16 %v213
        %v262 = vunpack.c.l.b16 %v214
        %v263 = vpack.c.b16 %v248, %v247
        %v264 = vpack.c.b16 %v250, %v249
        %v265 = vpack.c.b16 %v252, %v251
        %v266 = vpack.c.b16 %v254, %v253
        %v267 = vpack.c.b16 %v256, %v255
        %v268 = vpack.c.b16 %v258, %v257
        %v269 = vpack.c.b16 %v260, %v259
        %v270 = vpack.c.b16 %v262, %v261
        %v295 = vunpack.c.l.b16 %v215
        %v296 = vunpack.c.l.b16 %v216
        %v297 = vunpack.c.l.b16 %v217
        %v298 = vunpack.c.l.b16 %v218
        %v299 = vunpack.c.l.b16 %v219
        %v300 = vunpack.c.l.b16 %v220
        %v301 = vunpack.c.l.b16 %v221
        %v302 = vunpack.c.l.b16 %v222
        %v303 = vunpack.c.l.b16 %v223
        %v304 = vunpack.c.l.b16 %v224
        %v305 = vunpack.c.l.b16 %v225
        %v306 = vunpack.c.l.b16 %v226
        %v307 = vunpack.c.l.b16 %v227
        %v308 = vunpack.c.l.b16 %v228
        %v309 = vunpack.c.l.b16 %v229
        %v310 = vunpack.c.l.b16 %v230
        %v311 = vpack.c.b16 %v296, %v295
        %v312 = vpack.c.b16 %v298, %v297
        %v313 = vpack.c.b16 %v300, %v299
        %v314 = vpack.c.b16 %v302, %v301
        %v315 = vpack.c.b16 %v304, %v303
        %v316 = vpack.c.b16 %v306, %v305
        %v317 = vpack.c.b16 %v308, %v307
        %v318 = vpack.c.b16 %v310, %v309
        %327 = vmatprep.subr.bf16.mxu0 0
        %328 = vmatpush1.bf16.msra.mxu0 %v311
        %329 = vmatprep.subr.bf16.mxu0 0
        %330 = vmatpush1.bf16.msra.mxu0 %v312
        %331 = vmatprep.subr.bf16.mxu0 0
        %332 = vmatpush1.bf16.msra.mxu0 %v313
        %333 = vmatprep.subr.bf16.mxu0 0
        %334 = vmatpush1.bf16.msra.mxu0 %v314
        %335 = vmatprep.subr.bf16.mxu0 0
        %336 = vmatpush1.bf16.msra.mxu0 %v315
        %337 = vmatprep.subr.bf16.mxu0 0
        %338 = vmatpush1.bf16.msra.mxu0 %v316
        %339 = vmatprep.subr.bf16.mxu0 0
        %340 = vmatpush1.bf16.msra.mxu0 %v317
        %341 = vmatprep.subr.bf16.mxu0 0
        %342 = vmatpush1.bf16.msra.mxu0 %v318
        %343 = vmatprep.subr.bf16.mxu0 0
        %344 = vmatpush1.bf16.msra.mxu0 0
        %345 = vmatprep.subr.bf16.mxu0 0
        %346 = vmatpush1.bf16.msra.mxu0 0
        %347 = vmatprep.subr.bf16.mxu0 0
        %348 = vmatpush1.bf16.msra.mxu0 0
        %349 = vmatprep.subr.bf16.mxu0 0
        %350 = vmatpush1.bf16.msra.mxu0 0
        %351 = vmatprep.subr.bf16.mxu0 0
        %352 = vmatpush1.bf16.msra.mxu0 0
        %353 = vmatprep.subr.bf16.mxu0 0
        %354 = vmatpush1.bf16.msra.mxu0 0
        %355 = vmatprep.subr.bf16.mxu0 0
        %356 = vmatpush1.bf16.msra.mxu0 0
        %357 = vmatprep.subr.bf16.mxu0 0
        %358 = vmatpush1.bf16.msra.mxu0 0
        %359 = vmatprep.mubr.bf16.mxu0 0
        %360 = vmatmul.mubr.bf16.gmra.mrb[0].mxu0 %v263
        %v361 = vpop.f32.mrb[0].mxu0
        %v362 = vadd.f32 0.0, %v361
        %v363 = vpop.f32.mrb[0].mxu0
        %v364 = vpop.f32.mrb[0].mxu0
        %v365 = vadd.f32 0.0, %v364
        %v366 = vpop.f32.mrb[0].mxu0
        %367 = vmatprep.mubr.bf16.mxu0 0
        %368 = vmatmul.mubr.bf16.gmra.mrb[0].mxu0 %v264
        %v369 = vpop.f32.mrb[0].mxu0
        %v370 = vadd.f32 0.0, %v369
        %v371 = vpop.f32.mrb[0].mxu0
        %v372 = vpop.f32.mrb[0].mxu0
        %v373 = vadd.f32 0.0, %v372
        %v374 = vpop.f32.mrb[0].mxu0
        %375 = vmatprep.mubr.bf16.mxu0 0
        %376 = vmatmul.mubr.bf16.gmra.mrb[0].mxu0 %v265
        %v377 = vpop.f32.mrb[0].mxu0
        %v378 = vadd.f32 0.0, %v377
        %v379 = vpop.f32.mrb[0].mxu0
        %v380 = vpop.f32.mrb[0].mxu0
        %v381 = vadd.f32 0.0, %v380
        %v382 = vpop.f32.mrb[0].mxu0
        %383 = vmatprep.mubr.bf16.mxu0 0
        %384 = vmatmul.mubr.bf16.gmra.mrb[0].mxu0 %v266
        %v385 = vpop.f32.mrb[0].mxu0
        %v386 = vadd.f32 0.0, %v385
        %v387 = vpop.f32.mrb[0].mxu0
        %v388 = vpop.f32.mrb[0].mxu0
        %v389 = vadd.f32 0.0, %v388
        %v390 = vpop.f32.mrb[0].mxu0
        %391 = vmatprep.mubr.bf16.mxu0 0
        %392 = vmatmul.mubr.bf16.gmra.mrb[0].mxu0 %v267
        %v393 = vpop.f32.mrb[0].mxu0
        %v394 = vadd.f32 0.0, %v393
        %v395 = vpop.f32.mrb[0].mxu0
        %v396 = vpop.f32.mrb[0].mxu0
        %v397 = vadd.f32 0.0, %v396
        %v398 = vpop.f32.mrb[0].mxu0
        %399 = vmatprep.mubr.bf16.mxu0 0
        %400 = vmatmul.mubr.bf16.gmra.mrb[0].mxu0 %v268
        %v401 = vpop.f32.mrb[0].mxu0
        %v402 = vadd.f32 0.0, %v401
        %v403 = vpop.f32.mrb[0].mxu0
        %v404 = vpop.f32.mrb[0].mxu0
        %v405 = vadd.f32 0.0, %v404
        %v406 = vpop.f32.mrb[0].mxu0
        %407 = vmatprep.mubr.bf16.mxu0 0
        %408 = vmatmul.mubr.bf16.gmra.mrb[0].mxu0 %v269
        %v409 = vpop.f32.mrb[0].mxu0
        %v410 = vadd.f32 0.0, %v409
        %v411 = vpop.f32.mrb[0].mxu0
        %v412 = vpop.f32.mrb[0].mxu0
        %v413 = vadd.f32 0.0, %v412
        %v414 = vpop.f32.mrb[0].mxu0
        %415 = vmatprep.mubr.bf16.mxu0 0
        %416 = vmatmul.mubr.bf16.gmra.mrb[0].mxu0 %v270
        %v417 = vpop.f32.mrb[0].mxu0
        %v418 = vadd.f32 0.0, %v417
        %v419 = vpop.f32.mrb[0].mxu0
        %v420 = vpop.f32.mrb[0].mxu0
        %v421 = vadd.f32 0.0, %v420
        %v422 = vpop.f32.mrb[0].mxu0
        %423 = vdwg.mxu0
        %v424 = vmax.f32 %v362, 0.0
        %v425 = vmax.f32 %v365, 0.0
        %v426 = vmax.f32 %v370, 0.0
        %v427 = vmax.f32 %v373, 0.0
        %v428 = vmax.f32 %v378, 0.0
        %v429 = vmax.f32 %v381, 0.0
        %v430 = vmax.f32 %v386, 0.0
        %v431 = vmax.f32 %v389, 0.0
        %v432 = vmax.f32 %v394, 0.0
        %v433 = vmax.f32 %v397, 0.0
        %v434 = vmax.f32 %v402, 0.0
        %v435 = vmax.f32 %v405, 0.0
        %v436 = vmax.f32 %v410, 0.0
        %v437 = vmax.f32 %v413, 0.0
        %v438 = vmax.f32 %v418, 0.0
        %v439 = vmax.f32 %v421, 0.0
        %v440 = vld [vmem:[%s191] sm:$0x1]
        %v441 = vadd.f32 %v424, %v425
        %v442 = vadd.f32 %v441, %v426
        %v443 = vadd.f32 %v442, %v427
        %v444 = vadd.f32 %v443, %v428
        %v445 = vadd.f32 %v444, %v429
        %v446 = vadd.f32 %v445, %v430
        %v447 = vadd.f32 %v446, %v431
        %v448 = vadd.f32 %v447, %v432
        %v449 = vadd.f32 %v448, %v433
        %v450 = vadd.f32 %v449, %v434
        %v451 = vadd.f32 %v450, %v435
        %v452 = vadd.f32 %v451, %v436
        %v453 = vadd.f32 %v452, %v437
        %v454 = vadd.f32 %v453, %v438
        %v455 = vadd.f32 %v454, %v439
        %v456 = vrot.slane %v455, 4
        %v457 = vadd.f32 %v455, %v456
        %v458 = vrot.slane %v457, 2
        %v459 = vadd.f32 %v457, %v458
        %v460 = vrot.slane %v459, 1
        %v461 = vadd.f32 %v459, %v460
        %v462 = vadd.f32 %v440, %v461
        %463 = vst [vmem:[%s191] sm:$0x1] %v462
        %p464 = scmp.eq.s32.totalorder %s25, 1
        // Predicated region
        $region41: #{tpu_custom_call.1} parent=27 // pred_check
          %p465 = pneg %p464
        $region42: #{tpu_custom_call.1} parent=27 // pred_check_branch
          %467 = sbr.rel (%p465) target = $region44
        $region43: #{tpu_custom_call.1} parent=27 // pred_region
          %v468 = vld [vmem:[%s191] sm:$0x1]
          %v469 = vmul.f32 %v468, 0.00390625
          %470 = vst [vmem:[%s191] sm:$0x1] %v469
        $region44: #{tpu_custom_call.1} parent=27 // pred_fallthru
          _
        %s471 = sand.u32 %s89, 1
        %s472 = scalar_lea.sflag [#allocation4], %s471
        %s473 = sand.u32 %s89, 1
        %s474 = scalar_lea.vmem [#allocation7], %s473
        // Predicated region
        $region45: #{tpu_custom_call.1} parent=27 // pred_check
          %p475 = pneg %p99
        $region46: #{tpu_custom_call.1} parent=27 // pred_check_branch
          %477 = sbr.rel (%p475) target = $region48
        $region47: #{tpu_custom_call.1} parent=27 // pred_region
          %s479 = ssub.s32 16, 16
          %480 = vsyncadd %s472, %s479
          %s481 = smul.addr %s24, 16
          %s482 = scalar_lea.hbm %s2, %s481
          %s484 = sshll.u32 %s474, 4
          %s485 = int_to_ptr.vmem [resolvable:$true] %s484
          %487 = dma.vmem_to_hbm [thread:$0]  %s485, 16, %s482, %s472
        $region48: #{tpu_custom_call.1} parent=27 // pred_fallthru
          _
      $region28: #{tpu_custom_call.1} parent=5 // pred_fallthru
        _
      %p488 = scmp.le.s32.totalorder 2, %s15
      // Predicated region
      $region49: #{tpu_custom_call.1} parent=5 // pred_check
        %p489 = pneg %p488
      $region50: #{tpu_custom_call.1} parent=5 // pred_check_branch
        %491 = sbr.rel (%p489) target = $region52
      $region51: #{tpu_custom_call.1} parent=5 // pred_region
        %s492 = ssub.s32 %s15, 2
        // Predicated region
        $region53: #{tpu_custom_call.1} parent=51 // pred_check
          %p493 = pneg %p105
        $region54: #{tpu_custom_call.1} parent=51 // pred_check_branch
          %495 = sbr.rel (%p493) target = $region56
        $region55: #{tpu_custom_call.1} parent=51 // pred_region
          %s496 = sand.u32 %s90, 1
          %s497 = scalar_lea.sflag [#allocation4], %s496
          %s498 = sand.u32 %s90, 1
          %s499 = scalar_lea.vmem [#allocation7], %s498
          %500 = dma.done %s497, 16
        $region56: #{tpu_custom_call.1} parent=51 // pred_fallthru
          _
      $region52: #{tpu_custom_call.1} parent=5 // pred_fallthru
        _
    $region6: #{tpu_custom_call.1} parent=1 // loop_footer
      %s19 = sadd.s32 1, %s15
    $region7: #{tpu_custom_call.1} parent=1 // loop_footer_branch
      %14 = sbr.rel target = $region3
    $region8: #{tpu_custom_call.1} parent=1 // loop_exit
      _
    %501 = vsyncpa [#allocation3], 1
    %s502 = scalar_lea.sflag [#allocation3], 1
    %503 = vsyncpa %s502, 1
    %504 = vsyncpa [#allocation6], 1
    %505 = vsyncpa [#allocation4], 1
    %s506 = scalar_lea.sflag [#allocation4], 1
    %507 = vsyncpa %s506, 1

</llo_original>
